<compile_context>
chip_gen: v7x
topology: tpu7x:2x2x1
jax: 0.10.0
libtpu: 0.0.40
codegen_flags: <defaults>
</compile_context>

<pallas_src>
import functools

import jax
import jax.numpy as jnp
from jax.experimental import pallas as pl
from jax.experimental.pallas import tpu as pltpu

LANE = 128    # vreg lane width (hidden dim padded to this, VMEM-only)
SUBLANE = 8   # f32 sublane count


def _round_up(n, m):
    return ((n + m - 1) // m) * m


def mlp_kernel(x_ref, w1_ref, b1_ref, w2_ref, b2_ref, o_ref):
    # net1: x[tb,10] @ W1[10,128] + b1, then ReLU (f32 accumulation).
    h = jnp.dot(x_ref[...], w1_ref[...], preferred_element_type=jnp.float32)
    h = jnp.maximum(h + b1_ref[...], 0.0)          # b1 (1,128) broadcasts over rows
    # net2: h[tb,128] @ W2[128,5] + b2.
    y = jnp.dot(h, w2_ref[...], preferred_element_type=jnp.float32)
    o_ref[...] = (y + b2_ref[...]).astype(o_ref.dtype)


def prepare_params(w1, b1, w2, b2, dtype=jnp.float32):
    """Transpose PyTorch-layout params ONCE; pad only the hidden dim to 128.

    Padded hidden lanes are zero, ReLU(0)=0, and the corresponding w2 rows are
    zero, so they contribute nothing -- the result is exact.
    """
    hid, in_f = w1.shape          # nn.Linear stores [out_features, in_features]
    out_f = w2.shape[0]
    hid_p = _round_up(hid, LANE)

    w1_p = jnp.zeros((in_f, hid_p), dtype).at[:, :hid].set(w1.T.astype(dtype))
    b1_p = jnp.zeros((1, hid_p), dtype).at[0, :hid].set(b1.astype(dtype))
    w2_p = jnp.zeros((hid_p, out_f), dtype).at[:hid, :].set(w2.T.astype(dtype))
    b2_p = b2.astype(dtype).reshape(1, out_f)
    return (w1_p, b1_p, w2_p, b2_p), out_f


@functools.partial(jax.jit, static_argnames=("tile_b",))
def toy_model_forward(x, params, *, tile_b=4096):
    w1_p, b1_p, w2_p, b2_p = params
    batch, in_f = x.shape
    hid_p = w1_p.shape[1]
    out_f = w2_p.shape[1]

    # Batch tiling: pad batch only to a sublane multiple, then split it into
    # n_tiles near-equal 8-aligned tiles (no rounding up to a full tile_b).
    batch8 = _round_up(batch, SUBLANE)
    n_tiles = pl.cdiv(batch8, tile_b)
    if batch8 >= 2 * SUBLANE:
        n_tiles = max(n_tiles, 2)          # give v7x's 2nd TensorCore work
    tb = _round_up(pl.cdiv(batch8, n_tiles), SUBLANE)
    batch_p = tb * n_tiles

    if batch_p != batch:
        x_in = jnp.zeros((batch_p, in_f), x.dtype).at[:batch, :].set(x)
    else:
        x_in = x

    cost = pl.CostEstimate(
        flops=2 * batch * (in_f * hid_p + hid_p * out_f),
        transcendentals=0,
        bytes_accessed=batch * (in_f + out_f) * 4
        + (w1_p.size + b1_p.size + w2_p.size + b2_p.size) * 4,
    )

    out = pl.pallas_call(
        mlp_kernel,
        out_shape=jax.ShapeDtypeStruct((batch_p, out_f), x.dtype),
        grid=(n_tiles,),
        in_specs=[
            pl.BlockSpec((tb, in_f), lambda i: (i, 0)),       # x tile (pipelined), true width
            pl.BlockSpec((in_f, hid_p), lambda i: (0, 0)),    # W1 resident (10,128)
            pl.BlockSpec((1, hid_p), lambda i: (0, 0)),       # b1 resident (1,128)
            pl.BlockSpec((hid_p, out_f), lambda i: (0, 0)),   # W2 resident (128,5)
            pl.BlockSpec((1, out_f), lambda i: (0, 0)),       # b2 resident (1,5)
        ],
        out_specs=pl.BlockSpec((tb, out_f), lambda i: (i, 0)),  # true-width output
        compiler_params=pltpu.CompilerParams(
            dimension_semantics=("parallel",)),
        cost_estimate=cost,
    )(x_in, w1_p, b1_p, w2_p, b2_p)

    return out[:batch, :]


def init_params(key):
    """Deterministic init mimicking nn.Linear's default (uniform +/- 1/sqrt(fan_in))."""
    k1, k2, k3, k4 = jax.random.split(key, 4)
    bound1 = 1.0 / jnp.sqrt(10.0)
    w1 = jax.random.uniform(k1, (10, 10), jnp.float32, -bound1, bound1)
    b1 = jax.random.uniform(k2, (10,), jnp.float32, -bound1, bound1)
    bound2 = 1.0 / jnp.sqrt(10.0)
    w2 = jax.random.uniform(k3, (5, 10), jnp.float32, -bound2, bound2)
    b2 = jax.random.uniform(k4, (5,), jnp.float32, -bound2, bound2)
    return w1, b1, w2, b2


if __name__ == "__main__":
    key = jax.random.PRNGKey(0)
    kx, kp = jax.random.split(key)
    batch = 8
    x = jax.random.normal(kx, (batch, 10), jnp.float32)
    w1, b1, w2, b2 = init_params(kp)

    params, out_f = prepare_params(w1, b1, w2, b2)
    out = toy_model_forward(x, params)
    out = jax.block_until_ready(out)

    # Reference check in plain JAX (same semantics as the PyTorch module).
    ref = jnp.maximum(x @ w1.T + b1, 0.0) @ w2.T + b2
    assert out.shape == (batch, 5)
    assert jnp.allclose(out, ref, atol=1e-5, rtol=1e-5)

    print("KERNEL_OK")
</pallas_src>

<mosaic_0001>
module attributes {stable_mosaic.version = 11 : i64} {
  func.func @mlp_kernel(%arg0: i32, %arg1: memref<8x10xf32, #tpu.memory_space<vmem>>, %arg2: memref<10x128xf32, #tpu.memory_space<vmem>>, %arg3: memref<1x128xf32, #tpu.memory_space<vmem>>, %arg4: memref<128x5xf32, #tpu.memory_space<vmem>>, %arg5: memref<1x5xf32, #tpu.memory_space<vmem>>, %arg6: memref<8x5xf32, #tpu.memory_space<vmem>>) attributes {dimension_semantics = [#tpu.dimension_semantics<parallel>], iteration_bounds = array<i64: 1>, scalar_prefetch = 0 : i64, scratch_operands = 0 : i64, tpu.core_type = #tpu.core_type<tc>, window_params = [{transform_indices = @transform_0, window_bounds = array<i64: 8, 10>}, {pipeline_mode = #tpu.pipeline_mode<synchronous>, transform_indices = @transform_1, window_bounds = array<i64: 10, 128>}, {pipeline_mode = #tpu.pipeline_mode<synchronous>, transform_indices = @transform_2, window_bounds = array<i64: 1, 128>}, {pipeline_mode = #tpu.pipeline_mode<synchronous>, transform_indices = @transform_3, window_bounds = array<i64: 128, 5>}, {pipeline_mode = #tpu.pipeline_mode<synchronous>, transform_indices = @transform_4, window_bounds = array<i64: 1, 5>}, {transform_indices = @transform_5, window_bounds = array<i64: 8, 5>}]} {
    %c0 = arith.constant 0 : index
    %c0_0 = arith.constant 0 : index
    %0 = vector.load %arg1[%c0, %c0_0] : memref<8x10xf32, #tpu.memory_space<vmem>>, vector<8x10xf32>
    %c0_1 = arith.constant 0 : index
    %c0_2 = arith.constant 0 : index
    %1 = vector.load %arg2[%c0_1, %c0_2] : memref<10x128xf32, #tpu.memory_space<vmem>>, vector<10x128xf32>
    %cst = arith.constant dense<0.000000e+00> : vector<8x128xf32>
    %2 = tpu.matmul %0, %1, %cst {dimension_numbers = #tpu.dot_dimension_numbers<[1], [0], [0], [1], [0, 0, 1, 1], [], []>} : vector<8x10xf32>, vector<10x128xf32>, vector<8x128xf32> -> vector<8x128xf32>
    %c0_3 = arith.constant 0 : index
    %c0_4 = arith.constant 0 : index
    %3 = vector.load %arg3[%c0_3, %c0_4] : memref<1x128xf32, #tpu.memory_space<vmem>>, vector<1x128xf32>
    %4 = vector.broadcast %3 : vector<1x128xf32> to vector<8x128xf32>
    %5 = arith.addf %2, %4 : vector<8x128xf32>
    %cst_5 = arith.constant 0.000000e+00 : f32
    %6 = vector.broadcast %cst_5 : f32 to vector<8x128xf32>
    %7 = arith.maximumf %5, %6 : vector<8x128xf32>
    %c0_6 = arith.constant 0 : index
    %c0_7 = arith.constant 0 : index
    %8 = vector.load %arg4[%c0_6, %c0_7] : memref<128x5xf32, #tpu.memory_space<vmem>>, vector<128x5xf32>
    %cst_8 = arith.constant dense<0.000000e+00> : vector<8x5xf32>
    %9 = tpu.matmul %7, %8, %cst_8 {dimension_numbers = #tpu.dot_dimension_numbers<[1], [0], [0], [1], [0, 0, 1, 1], [], []>} : vector<8x128xf32>, vector<128x5xf32>, vector<8x5xf32> -> vector<8x5xf32>
    %c0_9 = arith.constant 0 : index
    %c0_10 = arith.constant 0 : index
    %10 = vector.load %arg5[%c0_9, %c0_10] : memref<1x5xf32, #tpu.memory_space<vmem>>, vector<1x5xf32>
    %11 = vector.broadcast %10 : vector<1x5xf32> to vector<8x5xf32>
    %12 = arith.addf %9, %11 : vector<8x5xf32>
    %c0_11 = arith.constant 0 : index
    %c0_12 = arith.constant 0 : index
    %13 = vector.load %arg6[%c0_11, %c0_12] : memref<8x5xf32, #tpu.memory_space<vmem>>, vector<8x5xf32>
    tpu.vector_store %arg6[%c0_11, %c0_12], %12 {strides = array<i32>} : memref<8x5xf32, #tpu.memory_space<vmem>>, vector<8x5xf32>,
    return
  }
  func.func @transform_0(%arg0: i32) -> (i32, i32) {
    %c0_i32 = arith.constant 0 : i32
    %c0_i32_0 = arith.constant 0 : i32
    return %arg0, %c0_i32 : i32, i32
  }
  func.func @transform_1(%arg0: i32) -> (i32, i32) {
    %c0_i32 = arith.constant 0 : i32
    %c0_i32_0 = arith.constant 0 : i32
    %c0_i32_1 = arith.constant 0 : i32
    return %c0_i32, %c0_i32_0 : i32, i32
  }
  func.func @transform_2(%arg0: i32) -> (i32, i32) {
    %c0_i32 = arith.constant 0 : i32
    %c0_i32_0 = arith.constant 0 : i32
    %c0_i32_1 = arith.constant 0 : i32
    return %c0_i32, %c0_i32_0 : i32, i32
  }
  func.func @transform_3(%arg0: i32) -> (i32, i32) {
    %c0_i32 = arith.constant 0 : i32
    %c0_i32_0 = arith.constant 0 : i32
    %c0_i32_1 = arith.constant 0 : i32
    return %c0_i32, %c0_i32_0 : i32, i32
  }
  func.func @transform_4(%arg0: i32) -> (i32, i32) {
    %c0_i32 = arith.constant 0 : i32
    %c0_i32_0 = arith.constant 0 : i32
    %c0_i32_1 = arith.constant 0 : i32
    return %c0_i32, %c0_i32_0 : i32, i32
  }
  func.func @transform_5(%arg0: i32) -> (i32, i32) {
    %c0_i32 = arith.constant 0 : i32
    %c0_i32_0 = arith.constant 0 : i32
    return %arg0, %c0_i32 : i32, i32
  }
}

</mosaic_0001>

<llo_original>
// kernel: toy_model_forward.1
$region0: #{toy_model_forward.1}
  #allocation0 [shape = 'u32[]', space=smem, size = 0x4, offset = 0x4, fixed_abs, tag = 'smem constant byte address 0x4 - core index']
  #allocation1 [shape = 'u32[144,128]{1,0:T(1,128)}', space=vmem, size = 0x12000, scoped, tag = 'internal scratch']
  %s0 = inlined_call_operand.vmem [shape: f32[8,10], index: 0, kind: input, shape index: {}]
  %s1 = inlined_call_operand.vmem [shape: f32[10,128], index: 1, kind: input, shape index: {}]
  %s2 = inlined_call_operand.vmem [shape: f32[1,128], index: 2, kind: input, shape index: {}]
  %s3 = inlined_call_operand.vmem [shape: f32[128,5], index: 3, kind: input, shape index: {}]
  %s4 = inlined_call_operand.vmem [shape: f32[1,5], index: 4, kind: input, shape index: {}]
  %s5 = inlined_call_operand.hbm [shape: f32[8,5], index: 5, kind: output, shape index: {}]
  %s6 = sld [smem:[#allocation0]]
  $region30: #{toy_model_forward.1} parent=0
    _
  %s8 = ssub.s32 1, %s6
  %s9 = scalar_select 0, %s8, %s6
  $region1: #{toy_model_forward.1} parent=0
    #allocation2 [shape = 'u8[4096]{0}', space=vmem, size = 0x1000, scoped, tag = 'output window, operand 0, single buffered']
    #allocation3 [shape = 's32[1]{0}', space=sflag, size = 0x4, scoped, tag = 'scoped memory for toy_model_forward.1']
    %10 = vsyncpa [#allocation3], 0
    // Predicated region
    $region2: #{toy_model_forward.1} parent=1 // pred_check
      _
    $region3: #{toy_model_forward.1} parent=1 // pred_check_branch
      %12 = sbr.rel (0) target = $region5
    $region4: #{toy_model_forward.1} parent=1 // pred_region
      _
    $region5: #{toy_model_forward.1} parent=1 // pred_fallthru
      _
    // Predicated region
    $region6: #{toy_model_forward.1} parent=1 // pred_check
      _
    $region7: #{toy_model_forward.1} parent=1 // pred_check_branch
      %14 = sbr.rel (0) target = $region9
    $region8: #{toy_model_forward.1} parent=1 // pred_region
      _
    $region9: #{toy_model_forward.1} parent=1 // pred_fallthru
      _
    // Predicated region
    $region10: #{toy_model_forward.1} parent=1 // pred_check
      _
    $region11: #{toy_model_forward.1} parent=1 // pred_check_branch
      %16 = sbr.rel (0) target = $region13
    $region12: #{toy_model_forward.1} parent=1 // pred_region
      _
    $region13: #{toy_model_forward.1} parent=1 // pred_fallthru
      _
    // Predicated region
    $region14: #{toy_model_forward.1} parent=1 // pred_check
      _
    $region15: #{toy_model_forward.1} parent=1 // pred_check_branch
      %18 = sbr.rel (0) target = $region17
    $region16: #{toy_model_forward.1} parent=1 // pred_region
      _
    $region17: #{toy_model_forward.1} parent=1 // pred_fallthru
      _
    // Predicated region
    $region18: #{toy_model_forward.1} parent=1 // pred_check
      _
    $region19: #{toy_model_forward.1} parent=1 // pred_check_branch
      %20 = sbr.rel (0) target = $region21
    $region20: #{toy_model_forward.1} parent=1 // pred_region
      _
    $region21: #{toy_model_forward.1} parent=1 // pred_fallthru
      _
    %v21 = vld [vmem:[%s0] sm:$0xff]
    %v22 = vld [vmem:[%s1] sm:$0xff]
    %v23 = vld [vmem:[%s1 + $0x8] sm:$0x3]
    %v24 = vld [vmem:[%s2] sm:$0x1]
    %v26 = vlaneseq
    %v27 = vshrl.u32 %v26, 7
    %v28 = vsub.s32 0, %v27
    %v29 = vrot.slane %v24, %v28
    %vm31 = vcmask 80896
    %v33 = vsel %vm31, %v21, 0
    %vm35 = vcmask 1041408
    %v37 = vsel %vm35, %v23, 0
    %39 = vmatprep.subr.mxu0 0.0
    %40 = vmatpush1.msra.mxu0 %v22
    %41 = vmatprep.subr.mxu0 0.0
    %42 = vmatpush1.msra.mxu0 %v37
    %43 = vmatprep.subr.mxu0 0.0
    %44 = vmatpush1.msra.mxu0 0.0
    %45 = vmatprep.subr.mxu0 0.0
    %46 = vmatpush1.msra.mxu0 0.0
    %47 = vmatprep.subr.mxu0 0.0
    %48 = vmatpush1.msra.mxu0 0.0
    %49 = vmatprep.subr.mxu0 0.0
    %50 = vmatpush1.msra.mxu0 0.0
    %51 = vmatprep.subr.mxu0 0.0
    %52 = vmatpush1.msra.mxu0 0.0
    %53 = vmatprep.subr.mxu0 0.0
    %54 = vmatpush1.msra.mxu0 0.0
    %55 = vmatprep.subr.mxu0 0.0
    %56 = vmatpush1.msra.mxu0 0.0
    %57 = vmatprep.subr.mxu0 0.0
    %58 = vmatpush1.msra.mxu0 0.0
    %59 = vmatprep.subr.mxu0 0.0
    %60 = vmatpush1.msra.mxu0 0.0
    %61 = vmatprep.subr.mxu0 0.0
    %62 = vmatpush1.msra.mxu0 0.0
    %63 = vmatprep.subr.mxu0 0.0
    %64 = vmatpush1.msra.mxu0 0.0
    %65 = vmatprep.subr.mxu0 0.0
    %66 = vmatpush1.msra.mxu0 0.0
    %67 = vmatprep.subr.mxu0 0.0
    %68 = vmatpush1.msra.mxu0 0.0
    %69 = vmatprep.subr.mxu0 0.0
    %70 = vmatpush1.msra.mxu0 0.0
    %71 = vmatprep.subr.mxu0 0.0
    %72 = vmatpush1.msra.mxu0 0.0
    %73 = vmatprep.subr.mxu0 0.0
    %74 = vmatpush1.msra.mxu0 0.0
    %75 = vmatprep.subr.mxu0 0.0
    %76 = vmatpush1.msra.mxu0 0.0
    %77 = vmatprep.subr.mxu0 0.0
    %78 = vmatpush1.msra.mxu0 0.0
    %79 = vmatprep.subr.mxu0 0.0
    %80 = vmatpush1.msra.mxu0 0.0
    %81 = vmatprep.subr.mxu0 0.0
    %82 = vmatpush1.msra.mxu0 0.0
    %83 = vmatprep.subr.mxu0 0.0
    %84 = vmatpush1.msra.mxu0 0.0
    %85 = vmatprep.subr.mxu0 0.0
    %86 = vmatpush1.msra.mxu0 0.0
    %87 = vmatprep.subr.mxu0 0.0
    %88 = vmatpush1.msra.mxu0 0.0
    %89 = vmatprep.subr.mxu0 0.0
    %90 = vmatpush1.msra.mxu0 0.0
    %91 = vmatprep.subr.mxu0 0.0
    %92 = vmatpush1.msra.mxu0 0.0
    %93 = vmatprep.subr.mxu0 0.0
    %94 = vmatpush1.msra.mxu0 0.0
    %95 = vmatprep.subr.mxu0 0.0
    %96 = vmatpush1.msra.mxu0 0.0
    %97 = vmatprep.subr.mxu0 0.0
    %98 = vmatpush1.msra.mxu0 0.0
    %99 = vmatprep.subr.mxu0 0.0
    %100 = vmatpush1.msra.mxu0 0.0
    %101 = vmatprep.subr.mxu0 0.0
    %102 = vmatpush1.msra.mxu0 0.0
    %103 = vmatprep.mubr.f32.mxu0 0.0
    %104 = vmatmul.mubr.f32.gmra.mrb[0].mxu0 %v33
    %v105 = vpop.f32.mrb[0].mxu0
    %v106 = vadd.f32 %v29, %v105
    %v107 = vpop.f32.mrb[0].mxu0
    %108 = vdwg.mxu0
    %v109 = vmax.f32 %v106, 0.0
    %v110 = vld [vmem:[%s3] sm:$0xff]
    %v111 = vld [vmem:[%s3 + $0x8] sm:$0xff]
    %v112 = vld [vmem:[%s3 + $0x10] sm:$0xff]
    %v113 = vld [vmem:[%s3 + $0x18] sm:$0xff]
    %v114 = vld [vmem:[%s3 + $0x20] sm:$0xff]
    %v115 = vld [vmem:[%s3 + $0x28] sm:$0xff]
    %v116 = vld [vmem:[%s3 + $0x30] sm:$0xff]
    %v117 = vld [vmem:[%s3 + $0x38] sm:$0xff]
    %v118 = vld [vmem:[%s3 + $0x40] sm:$0xff]
    %v119 = vld [vmem:[%s3 + $0x48] sm:$0xff]
    %v120 = vld [vmem:[%s3 + $0x50] sm:$0xff]
    %v121 = vld [vmem:[%s3 + $0x58] sm:$0xff]
    %v122 = vld [vmem:[%s3 + $0x60] sm:$0xff]
    %v123 = vld [vmem:[%s3 + $0x68] sm:$0xff]
    %v124 = vld [vmem:[%s3 + $0x70] sm:$0xff]
    %v125 = vld [vmem:[%s3 + $0x78] sm:$0xff]
    %v126 = vld [vmem:[%s4] sm:$0x1]
    %v128 = vlaneseq
    %v129 = vshrl.u32 %v128, 7
    %v130 = vsub.s32 0, %v129
    %v131 = vrot.slane %v126, %v130
    %133 = vmatprep.subr.mxu0 0.0
    %134 = vmatpush1.msra.mxu0 %v110
    %135 = vmatprep.subr.mxu0 0.0
    %136 = vmatpush1.msra.mxu0 %v111
    %137 = vmatprep.subr.mxu0 0.0
    %138 = vmatpush1.msra.mxu0 %v112
    %139 = vmatprep.subr.mxu0 0.0
    %140 = vmatpush1.msra.mxu0 %v113
    %141 = vmatprep.subr.mxu0 0.0
    %142 = vmatpush1.msra.mxu0 %v114
    %143 = vmatprep.subr.mxu0 0.0
    %144 = vmatpush1.msra.mxu0 %v115
    %145 = vmatprep.subr.mxu0 0.0
    %146 = vmatpush1.msra.mxu0 %v116
    %147 = vmatprep.subr.mxu0 0.0
    %148 = vmatpush1.msra.mxu0 %v117
    %149 = vmatprep.subr.mxu0 0.0
    %150 = vmatpush1.msra.mxu0 %v118
    %151 = vmatprep.subr.mxu0 0.0
    %152 = vmatpush1.msra.mxu0 %v119
    %153 = vmatprep.subr.mxu0 0.0
    %154 = vmatpush1.msra.mxu0 %v120
    %155 = vmatprep.subr.mxu0 0.0
    %156 = vmatpush1.msra.mxu0 %v121
    %157 = vmatprep.subr.mxu0 0.0
    %158 = vmatpush1.msra.mxu0 %v122
    %159 = vmatprep.subr.mxu0 0.0
    %160 = vmatpush1.msra.mxu0 %v123
    %161 = vmatprep.subr.mxu0 0.0
    %162 = vmatpush1.msra.mxu0 %v124
    %163 = vmatprep.subr.mxu0 0.0
    %164 = vmatpush1.msra.mxu0 %v125
    %165 = vmatprep.subr.mxu0 0.0
    %166 = vmatpush1.msra.mxu0 0.0
    %167 = vmatprep.subr.mxu0 0.0
    %168 = vmatpush1.msra.mxu0 0.0
    %169 = vmatprep.subr.mxu0 0.0
    %170 = vmatpush1.msra.mxu0 0.0
    %171 = vmatprep.subr.mxu0 0.0
    %172 = vmatpush1.msra.mxu0 0.0
    %173 = vmatprep.subr.mxu0 0.0
    %174 = vmatpush1.msra.mxu0 0.0
    %175 = vmatprep.subr.mxu0 0.0
    %176 = vmatpush1.msra.mxu0 0.0
    %177 = vmatprep.subr.mxu0 0.0
    %178 = vmatpush1.msra.mxu0 0.0
    %179 = vmatprep.subr.mxu0 0.0
    %180 = vmatpush1.msra.mxu0 0.0
    %181 = vmatprep.subr.mxu0 0.0
    %182 = vmatpush1.msra.mxu0 0.0
    %183 = vmatprep.subr.mxu0 0.0
    %184 = vmatpush1.msra.mxu0 0.0
    %185 = vmatprep.subr.mxu0 0.0
    %186 = vmatpush1.msra.mxu0 0.0
    %187 = vmatprep.subr.mxu0 0.0
    %188 = vmatpush1.msra.mxu0 0.0
    %189 = vmatprep.subr.mxu0 0.0
    %190 = vmatpush1.msra.mxu0 0.0
    %191 = vmatprep.subr.mxu0 0.0
    %192 = vmatpush1.msra.mxu0 0.0
    %193 = vmatprep.subr.mxu0 0.0
    %194 = vmatpush1.msra.mxu0 0.0
    %195 = vmatprep.subr.mxu0 0.0
    %196 = vmatpush1.msra.mxu0 0.0
    %197 = vmatprep.mubr.f32.mxu0 0.0
    %198 = vmatmul.mubr.f32.gmra.mrb[0].mxu0 %v109
    %v199 = vpop.f32.mrb[0].mxu0
    %v200 = vadd.f32 %v131, %v199
    %v201 = vpop.f32.mrb[0].mxu0
    %202 = vdwg.mxu0
    %vm203 = vcmask 39936
    %204 = vst.msk [vmem:[#allocation2] sm:$0xff] %vm203, %v200
    // Predicated region
    $region22: #{toy_model_forward.1} parent=1 // pred_check
      _
    $region23: #{toy_model_forward.1} parent=1 // pred_check_branch
      %206 = sbr.rel (0) target = $region25
    $region24: #{toy_model_forward.1} parent=1 // pred_region
      %s208 = ssub.s32 128, 128
      %209 = vsyncadd [#allocation3], %s208
      %s211 = sshll.u32 [#allocation2], 4
      %s212 = int_to_ptr.vmem [resolvable:$true] %s211
      %214 = dma.vmem_to_hbm [thread:$0]  %s212, 128, %s5, [#allocation3]
    $region25: #{toy_model_forward.1} parent=1 // pred_fallthru
      _
    // Predicated region
    $region26: #{toy_model_forward.1} parent=1 // pred_check
      _
    $region27: #{toy_model_forward.1} parent=1 // pred_check_branch
      %216 = sbr.rel (0) target = $region29
    $region28: #{toy_model_forward.1} parent=1 // pred_region
      %217 = dma.done [#allocation3], 128
    $region29: #{toy_model_forward.1} parent=1 // pred_fallthru
      _
    %218 = vsyncpa [#allocation3], 1

</llo_original>
